<compile_context>
chip_gen: v6e
topology: v6e:2x2x1
jax: 0.10.0
libtpu: 0.0.40
codegen_flags: <defaults>
</compile_context>

<pallas_src>
import math
from functools import partial

import jax
import jax.numpy as jnp
from jax.experimental import pallas as pl
from jax.experimental.pallas import tpu as pltpu


# ---------------------------------------------------------------------------
# Kernel: per-(batch, patch-tile) projection   y = patches @ W + b
# ---------------------------------------------------------------------------
def patch_embed_kernel(x_ref, w_ref, b_ref, out_ref):
    # x_ref  : (1, tn, K)   flattened patch tile (compute dtype, e.g. bf16)
    # w_ref  : (K, E)       projection weight, (in, out) layout -- resident
    # b_ref  : (1, E)       bias, f32 -- resident
    # out_ref: (1, tn, E)   output tile, lane-dense in E
    acc = jnp.dot(x_ref[0], w_ref[...], preferred_element_type=jnp.float32)  # (tn, E)
    acc = acc + b_ref[...]                                                   # f32 bias add
    out_ref[0] = acc.astype(out_ref.dtype)


# ---------------------------------------------------------------------------
# Patch-axis tile selection: fixed cap + cdiv grid (handles ragged tails)
# ---------------------------------------------------------------------------
def _pick_patch_tile(num_patches, batch):
    """Patch-axis tile size.

    - capped at 512 rows (keeps the per-step working set comfortably inside the
      default scoped-VMEM budget, including v7x's smaller 64 MiB part),
    - multiple of 8 (sublane) unless it spans the full patch axis,
    - ensures the (batch, patch-tile) grid has ~4+ steps so the DMA/compute
      pipeline overlaps and both v7x TensorCores get work even at batch=1.
    """
    cap = 512
    min_tiles = max(1, -(-4 // batch))                 # ceil(4 / batch)
    tn = min(cap, -(-num_patches // min_tiles))        # ceil(num_patches / min_tiles)
    if tn < num_patches:
        tn = max(8, (tn // 8) * 8)                     # sublane-aligned partial blocks
    if tn >= num_patches:
        return num_patches                             # full axis: always a legal block
    return tn


# ---------------------------------------------------------------------------
# Wrapper
# ---------------------------------------------------------------------------
def patch_embed_forward(x, weight, bias, patch_size, *, compute_dtype=jnp.bfloat16):
    """
    x      : (B, C, H, W)
    weight : (E, C, P, P)   nn.Conv2d weight layout
    bias   : (E,)
    returns: (B, num_patches, E), num_patches = (H//P) * (W//P)
    """
    B, C, H, W = x.shape
    P = int(patch_size)                       # square patches (to_2tuple(int) case)
    assert H % P == 0 and W % P == 0, "image size must be divisible by patch size"
    Hp, Wp = H // P, W // P
    N = Hp * Wp
    E = weight.shape[0]
    K = C * P * P

    # --- channels-last patchify (layout-only glue, no FLOPs) -------------------
    # K axis ordering is (i, j, c); patch index iterates row-major (Hp, Wp) to
    # match conv(...).flatten(2).transpose(1, 2).  bf16 cast is folded into the
    # same XLA copy so the materialized patch tensor is half the bytes.
    xl = jnp.transpose(x, (0, 2, 3, 1)).astype(compute_dtype)        # (B, H, W, C)
    patches = xl.reshape(B, Hp, P, Wp, P, C)                         # (B,Hp,i,Wp,j,C)
    patches = jnp.transpose(patches, (0, 1, 3, 2, 4, 5))             # (B,Hp,Wp,i,j,C)
    patches = patches.reshape(B, N, K)

    # --- one-time weight/bias layout change: (E,C,P,P) -> (K=(i,j,c), E) -------
    # TODO(synk): for static weights, hoist this (and the bf16 cast) out of the
    # per-call jit so the (E,K)->(K,E) copy is not re-emitted every forward.
    w_kE = jnp.transpose(weight, (2, 3, 1, 0)).reshape(K, E).astype(compute_dtype)
    bias2d = bias.reshape(1, E).astype(jnp.float32)

    tn = _pick_patch_tile(N, B)
    grid = (B, pl.cdiv(N, tn))

    out_dtype = x.dtype
    cost = pl.CostEstimate(
        flops=2 * B * N * K * E,
        transcendentals=0,
        bytes_accessed=(B * N * K * jnp.dtype(compute_dtype).itemsize
                        + K * E * jnp.dtype(compute_dtype).itemsize
                        + E * 4
                        + B * N * E * jnp.dtype(out_dtype).itemsize),
    )

    out = pl.pallas_call(
        patch_embed_kernel,
        out_shape=jax.ShapeDtypeStruct((B, N, E), out_dtype),
        grid_spec=pltpu.PrefetchScalarGridSpec(
            num_scalar_prefetch=0,
            grid=grid,
            in_specs=[
                # patch tile: pipelined (default double-buffered)
                pl.BlockSpec((1, tn, K), lambda b, t: (b, t, 0)),
                # weight / bias: constant index_map -> resident, single-buffered
                pl.BlockSpec((K, E), lambda b, t: (0, 0),
                             pipeline_mode=pl.Buffered(1)),
                pl.BlockSpec((1, E), lambda b, t: (0, 0),
                             pipeline_mode=pl.Buffered(1)),
            ],
            out_specs=pl.BlockSpec((1, tn, E), lambda b, t: (b, t, 0)),
        ),
        compiler_params=pltpu.CompilerParams(
            dimension_semantics=("parallel", "parallel")),
        cost_estimate=cost,
    )(patches, w_kE, bias2d)

    return out


# ---------------------------------------------------------------------------
# Pure-JAX reference (mirrors the PyTorch forward exactly, via a real f32 conv)
# ---------------------------------------------------------------------------
def reference_forward(x, weight, bias, patch_size):
    out = jax.lax.conv_general_dilated(
        x, weight,
        window_strides=(patch_size, patch_size),
        padding="VALID",
        dimension_numbers=("NCHW", "OIHW", "NCHW"))
    out = out + bias.reshape(1, -1, 1, 1)
    B, E, Hp, Wp = out.shape
    return jnp.transpose(out.reshape(B, E, Hp * Wp), (0, 2, 1))   # flatten(2).transpose(1,2)


if __name__ == "__main__":
    key = jax.random.PRNGKey(0)

    # Small shapes consistent with PatchEmbed: batch=2, in_chans=3, 16x16 image,
    # patch 4 -> num_patches = 16, K = 48, embed_dim = 32.
    B, C, img, P, E = 2, 3, 16, 4, 32

    k1, k2, k3 = jax.random.split(key, 3)
    x = jax.random.normal(k1, (B, C, img, img), dtype=jnp.float32)
    fan_in = C * P * P
    w = jax.random.normal(k2, (E, C, P, P), dtype=jnp.float32) / math.sqrt(fan_in)
    b = jax.random.normal(k3, (E,), dtype=jnp.float32) * 0.02

    fwd = jax.jit(patch_embed_forward, static_argnames=("patch_size", "compute_dtype"))
    out = jax.block_until_ready(fwd(x, w, b, patch_size=P))

    ref = reference_forward(x, w, b, P)
    num_patches = (img // P) * (img // P)
    assert out.shape == (B, num_patches, E), out.shape
    # Loose tolerance: MXU operands are bf16 (accumulation in f32); indexing /
    # permutation bugs would show up as O(1) errors, well outside this band.
    assert jnp.allclose(out, ref, atol=5e-2, rtol=5e-2), "mismatch vs reference"

    print("KERNEL_OK")
</pallas_src>

<mosaic_0001>
module attributes {stable_mosaic.version = 11 : i64} {
  func.func @patch_embed_kernel(%arg0: i32, %arg1: i32, %arg2: memref<1x8x48xbf16, #tpu.memory_space<vmem>>, %arg3: memref<48x32xbf16, #tpu.memory_space<vmem>>, %arg4: memref<1x32xf32, #tpu.memory_space<vmem>>, %arg5: memref<1x8x32xf32, #tpu.memory_space<vmem>>) attributes {dimension_semantics = [#tpu.dimension_semantics<parallel>, #tpu.dimension_semantics<parallel>], iteration_bounds = array<i64: 2, 2>, scalar_prefetch = 0 : i64, scratch_operands = 0 : i64, tpu.core_type = #tpu.core_type<tc>, window_params = [{transform_indices = @transform_0, window_bounds = array<i64: 1, 8, 48>}, {pipeline_mode = #tpu.pipeline_mode<synchronous>, transform_indices = @transform_1, window_bounds = array<i64: 48, 32>}, {pipeline_mode = #tpu.pipeline_mode<synchronous>, transform_indices = @transform_2, window_bounds = array<i64: 1, 32>}, {transform_indices = @transform_3, window_bounds = array<i64: 1, 8, 32>}]} {
    %c0 = arith.constant 0 : index
    %c0_0 = arith.constant 0 : index
    %c0_1 = arith.constant 0 : index
    %0 = vector.load %arg2[%c0, %c0_0, %c0_1] : memref<1x8x48xbf16, #tpu.memory_space<vmem>>, vector<1x8x48xbf16>
    %1 = vector.shape_cast %0 : vector<1x8x48xbf16> to vector<8x48xbf16>
    %c0_2 = arith.constant 0 : index
    %c0_3 = arith.constant 0 : index
    %2 = vector.load %arg3[%c0_2, %c0_3] : memref<48x32xbf16, #tpu.memory_space<vmem>>, vector<48x32xbf16>
    %cst = arith.constant dense<0.000000e+00> : vector<8x32xf32>
    %3 = tpu.matmul %1, %2, %cst {dimension_numbers = #tpu.dot_dimension_numbers<[1], [0], [0], [1], [0, 0, 1, 1], [], []>} : vector<8x48xbf16>, vector<48x32xbf16>, vector<8x32xf32> -> vector<8x32xf32>
    %c0_4 = arith.constant 0 : index
    %c0_5 = arith.constant 0 : index
    %4 = vector.load %arg4[%c0_4, %c0_5] : memref<1x32xf32, #tpu.memory_space<vmem>>, vector<1x32xf32>
    %5 = vector.broadcast %4 : vector<1x32xf32> to vector<8x32xf32>
    %6 = arith.addf %3, %5 : vector<8x32xf32>
    %c0_6 = arith.constant 0 : index
    %c0_7 = arith.constant 0 : index
    %c0_8 = arith.constant 0 : index
    %7 = vector.load %arg5[%c0_6, %c0_7, %c0_8] : memref<1x8x32xf32, #tpu.memory_space<vmem>>, vector<1x8x32xf32>
    %8 = vector.shape_cast %7 : vector<1x8x32xf32> to vector<8x32xf32>
    %9 = vector.shape_cast %6 : vector<8x32xf32> to vector<1x8x32xf32>
    tpu.vector_store %arg5[%c0_6, %c0_7, %c0_8], %9 {strides = array<i32>} : memref<1x8x32xf32, #tpu.memory_space<vmem>>, vector<1x8x32xf32>,
    return
  }
  func.func @transform_0(%arg0: i32, %arg1: i32) -> (i32, i32, i32) {
    %c0_i32 = arith.constant 0 : i32
    %c0_i32_0 = arith.constant 0 : i32
    return %arg0, %arg1, %c0_i32 : i32, i32, i32
  }
  func.func @transform_1(%arg0: i32, %arg1: i32) -> (i32, i32) {
    %c0_i32 = arith.constant 0 : i32
    %c0_i32_0 = arith.constant 0 : i32
    %c0_i32_1 = arith.constant 0 : i32
    return %c0_i32, %c0_i32_0 : i32, i32
  }
  func.func @transform_2(%arg0: i32, %arg1: i32) -> (i32, i32) {
    %c0_i32 = arith.constant 0 : i32
    %c0_i32_0 = arith.constant 0 : i32
    %c0_i32_1 = arith.constant 0 : i32
    return %c0_i32, %c0_i32_0 : i32, i32
  }
  func.func @transform_3(%arg0: i32, %arg1: i32) -> (i32, i32, i32) {
    %c0_i32 = arith.constant 0 : i32
    %c0_i32_0 = arith.constant 0 : i32
    return %arg0, %arg1, %c0_i32 : i32, i32, i32
  }
}

</mosaic_0001>

<llo_original>
// kernel: patch_embed_forward.1
$region0: #{patch_embed_forward.1}
  #allocation0 [shape = 'u32[]', space=smem, size = 0x4, offset = 0x4, fixed_abs, tag = 'smem constant byte address 0x4 - core index']
  #allocation1 [shape = 'u32[144,128]{1,0:T(1,128)}', space=vmem, size = 0x12000, scoped, tag = 'internal scratch']
  %s0 = inlined_call_operand.vmem [shape: bf16[2,16,48], index: 0, kind: input, shape index: {}]
  %s1 = inlined_call_operand.vmem [shape: bf16[48,32], index: 1, kind: input, shape index: {}]
  %s2 = inlined_call_operand.vmem [shape: f32[1,32], index: 2, kind: input, shape index: {}]
  %s3 = inlined_call_operand.hbm [shape: f32[2,16,32], index: 3, kind: output, shape index: {}]
  %s4 = sld [smem:[#allocation0]]
  $region45: #{patch_embed_forward.1} parent=0
    _
  %s6 = ssub.s32 1, %s4
  %s7 = scalar_select 0, %s6, %s4
  $region1: #{patch_embed_forward.1} parent=0
    #allocation2 [shape = 'u8[8192]{0}', space=vmem, size = 0x2000, scoped, tag = 'output window, operand 0']
    #allocation3 [shape = 's32[2]{0}', space=sflag, size = 0x8, scoped, tag = 'scoped memory for patch_embed_forward.1']
    %8 = vsyncpa [#allocation3], 0
    %s9 = scalar_lea.sflag [#allocation3], 1
    %10 = vsyncpa %s9, 0
    loop: start=0, step=1, limit=6
    $region2: #{patch_embed_forward.1} parent=1 // loop_pre_header
      _
    $region3: #{patch_embed_forward.1} parent=1 // loop_header
      %s12 = sphi 0, %s16
      %p13 = scmp.ge.s32.totalorder %s12, 6
      %s19 = sphi 0, %s31
      %s20 = sphi 0, %s27
      %s21 = sphi 0, %s19
      %s22 = sphi 0, %s20
      %s23 = sphi 0, %s21
      %s24 = sphi 0, %s22
      %s36 = sphi 0, %s38
      %s39 = sphi 0, %s36
      %s40 = sphi 0, %s39
      %s56 = sphi 0, %s40
      %s60 = sphi 0, %s60
      %s62 = sphi 0, %s60
      %s63 = sphi 0, %s62
      %s77 = sphi 0, %s63
      %s81 = sphi 0, %s81
      %s83 = sphi 0, %s81
      %s84 = sphi 0, %s83
      %s98 = sphi 0, %s84
      %s106 = sphi 0, %s108
      %s109 = sphi 0, %s106
      %s110 = sphi 0, %s109
      %s126 = sphi 0, %s110
    $region4: #{patch_embed_forward.1} parent=1 // loop_header_branch
      %15 = sbr.rel (%p13) target = $region8
    $region5: #{patch_embed_forward.1} parent=1 // loop_body
      %s17 = ssub.s32 %s12, 1
      %s18 = ssub.s32 %s12, 2
      %s25 = sadd.s32 1, %s20
      %p26 = scmp.ge.s32.totalorder %s25, 2
      %s27 = scalar_select %p26, 0, %s25
      %s28 = sadd.s32 1, %s19
      %s29 = scalar_select %p26, %s28, %s19
      %p30 = scmp.ge.s32.totalorder %s29, 2
      %s31 = scalar_select %p30, 0, %s29
      %s32 = ssub.s32 %s19, %s31
      %s33 = ssub.s32 %s20, %s27
      %s34 = sor.u32 %s32, %s33
      %p35 = scmp.eq.s32.totalorder %s34, 0
      %s37 = sadd.s32 %s36, 1
      %s38 = scalar_select %p35, %s36, %s37
      %p41 = pneg %p35
      %p42 = scmp.eq.s32.totalorder %s12, 3
      %p43 = por %p41, %p42
      %p44 = scmp.ne.s32.totalorder %s36, %s39
      %p45 = scmp.eq.s32.totalorder %s12, 0
      %p46 = por %p44, %p45
      %p47 = scmp.ne.s32.totalorder %s36, %s39
      %p48 = scmp.eq.s32.totalorder %s17, 3
      %p49 = por %p47, %p48
      %p50 = scmp.ne.s32.totalorder %s39, %s40
      %p51 = scmp.eq.s32.totalorder %s17, 0
      %p52 = por %p50, %p51
      %p53 = scmp.ne.s32.totalorder %s39, %s40
      %p54 = scmp.eq.s32.totalorder %s18, 3
      %p55 = por %p53, %p54
      %p57 = scmp.ne.s32.totalorder %s40, %s56
      %p58 = scmp.eq.s32.totalorder %s18, 0
      %p59 = por %p57, %p58
      %s61 = sadd.s32 %s60, 1
      %p64 = scmp.eq.s32.totalorder %s12, 3
      %p65 = scmp.ne.s32.totalorder %s60, %s62
      %p66 = scmp.eq.s32.totalorder %s12, 0
      %p67 = por %p65, %p66
      %p68 = scmp.ne.s32.totalorder %s60, %s62
      %p69 = scmp.eq.s32.totalorder %s17, 3
      %p70 = por %p68, %p69
      %p71 = scmp.ne.s32.totalorder %s62, %s63
      %p72 = scmp.eq.s32.totalorder %s17, 0
      %p73 = por %p71, %p72
      %p74 = scmp.ne.s32.totalorder %s62, %s63
      %p75 = scmp.eq.s32.totalorder %s18, 3
      %p76 = por %p74, %p75
      %p78 = scmp.ne.s32.totalorder %s63, %s77
      %p79 = scmp.eq.s32.totalorder %s18, 0
      %p80 = por %p78, %p79
      %s82 = sadd.s32 %s81, 1
      %p85 = scmp.eq.s32.totalorder %s12, 3
      %p86 = scmp.ne.s32.totalorder %s81, %s83
      %p87 = scmp.eq.s32.totalorder %s12, 0
      %p88 = por %p86, %p87
      %p89 = scmp.ne.s32.totalorder %s81, %s83
      %p90 = scmp.eq.s32.totalorder %s17, 3
      %p91 = por %p89, %p90
      %p92 = scmp.ne.s32.totalorder %s83, %s84
      %p93 = scmp.eq.s32.totalorder %s17, 0
      %p94 = por %p92, %p93
      %p95 = scmp.ne.s32.totalorder %s83, %s84
      %p96 = scmp.eq.s32.totalorder %s18, 3
      %p97 = por %p95, %p96
      %p99 = scmp.ne.s32.totalorder %s84, %s98
      %p100 = scmp.eq.s32.totalorder %s18, 0
      %p101 = por %p99, %p100
      %s102 = ssub.s32 %s19, %s31
      %s103 = ssub.s32 %s20, %s27
      %s104 = sor.u32 %s102, %s103
      %p105 = scmp.eq.s32.totalorder %s104, 0
      %s107 = sadd.s32 %s106, 1
      %s108 = scalar_select %p105, %s106, %s107
      %p111 = pneg %p105
      %p112 = scmp.eq.s32.totalorder %s12, 3
      %p113 = por %p111, %p112
      %p114 = scmp.ne.s32.totalorder %s106, %s109
      %p115 = scmp.eq.s32.totalorder %s12, 0
      %p116 = por %p114, %p115
      %p117 = scmp.ne.s32.totalorder %s106, %s109
      %p118 = scmp.eq.s32.totalorder %s17, 3
      %p119 = por %p117, %p118
      %p120 = scmp.ne.s32.totalorder %s109, %s110
      %p121 = scmp.eq.s32.totalorder %s17, 0
      %p122 = por %p120, %p121
      %p123 = scmp.ne.s32.totalorder %s109, %s110
      %p124 = scmp.eq.s32.totalorder %s18, 3
      %p125 = por %p123, %p124
      %p127 = scmp.ne.s32.totalorder %s110, %s126
      %p128 = scmp.eq.s32.totalorder %s18, 0
      %p129 = por %p127, %p128
      %p130 = scmp.le.s32.totalorder 1, %s12
      %p131 = scmp.lt.s32.totalorder %s12, 5
      %p132 = pnand %p130, %p131
      %p133 = pneg %p132
      // Predicated region
      $region9: #{patch_embed_forward.1} parent=5 // pred_check
        _
      $region10: #{patch_embed_forward.1} parent=5 // pred_check_branch
        %135 = sbr.rel (%p132) target = $region12
      $region11: #{patch_embed_forward.1} parent=5 // pred_region
        %s136 = ssub.s32 %s12, 1
        // Predicated region
        $region13: #{patch_embed_forward.1} parent=11 // pred_check
          %p137 = pneg %p73
        $region14: #{patch_embed_forward.1} parent=11 // pred_check_branch
          %139 = sbr.rel (%p137) target = $region16
        $region15: #{patch_embed_forward.1} parent=11 // pred_region
          _
        $region16: #{patch_embed_forward.1} parent=11 // pred_fallthru
          _
        // Predicated region
        $region17: #{patch_embed_forward.1} parent=11 // pred_check
          %p140 = pneg %p94
        $region18: #{patch_embed_forward.1} parent=11 // pred_check_branch
          %142 = sbr.rel (%p140) target = $region20
        $region19: #{patch_embed_forward.1} parent=11 // pred_region
          _
        $region20: #{patch_embed_forward.1} parent=11 // pred_fallthru
          _
      $region12: #{patch_embed_forward.1} parent=5 // pred_fallthru
        _
      %p143 = scmp.lt.s32.totalorder %s12, 4
      // Predicated region
      $region21: #{patch_embed_forward.1} parent=5 // pred_check
        %p144 = pneg %p143
      $region22: #{patch_embed_forward.1} parent=5 // pred_check_branch
        %146 = sbr.rel (%p144) target = $region24
      $region23: #{patch_embed_forward.1} parent=5 // pred_region
        // Predicated region
        $region25: #{patch_embed_forward.1} parent=23 // pred_check
          %p147 = pneg %p46
        $region26: #{patch_embed_forward.1} parent=23 // pred_check_branch
          %149 = sbr.rel (%p147) target = $region28
        $region27: #{patch_embed_forward.1} parent=23 // pred_region
          %p150 = scmp.lt.s32.totalorder %s19, 1
          %s151 = scalar_select %p150, %s19, 1
          %p152 = scmp.lt.s32.totalorder %s20, 1
          %s153 = scalar_select %p152, %s20, 1
          %s154 = smul.addr %s151, 2
          %s155 = sadd.s32 %s153, %s154
          %s156 = smul.addr %s155, 4
          %s157 = scalar_lea.vmem %s0, %s156
        $region28: #{patch_embed_forward.1} parent=23 // pred_fallthru
          _
      $region24: #{patch_embed_forward.1} parent=5 // pred_fallthru
        _
      %p158 = scmp.le.s32.totalorder 1, %s12
      %p159 = scmp.lt.s32.totalorder %s12, 5
      %p160 = pnand %p158, %p159
      %p161 = pneg %p160
      // Predicated region
      $region29: #{patch_embed_forward.1} parent=5 // pred_check
        _
      $region30: #{patch_embed_forward.1} parent=5 // pred_check_branch
        %163 = sbr.rel (%p160) target = $region32
      $region31: #{patch_embed_forward.1} parent=5 // pred_region
        %s164 = ssub.s32 %s12, 1
        %p165 = scmp.lt.s32.totalorder %s21, 1
        %s166 = scalar_select %p165, %s21, 1
        %p167 = scmp.lt.s32.totalorder %s22, 1
        %s168 = scalar_select %p167, %s22, 1
        %s169 = smul.addr %s166, 2
        %s170 = sadd.s32 %s168, %s169
        %s171 = smul.addr %s170, 4
        %s172 = scalar_lea.vmem %s0, %s171
        %p173 = pneg %p52
        %p174 = pneg %p49
        %p175 = pneg %p73
        %p176 = pneg %p70
        %p177 = pneg %p94
        %p178 = pneg %p91
        %p179 = pneg %p122
        %p180 = pneg %p119
        %s181 = sand.u32 %s109, 1
        %s182 = scalar_lea.sflag [#allocation3], %s181
        %s183 = sand.u32 %s109, 1
        %s184 = smul.addr %s183, 8
        %s185 = scalar_lea.vmem [#allocation2], %s184
        %p186 = scmp.lt.s32.totalorder %s21, 1
        %s187 = scalar_select %p186, %s21, 1
        %p188 = scmp.lt.s32.totalorder %s22, 1
        %s189 = scalar_select %p188, %s22, 1
        %s190 = smul.addr %s187, 2
        %s191 = sadd.s32 %s189, %s190
        %s192 = smul.addr %s191, 4
        %s193 = scalar_lea.vmem %s0, %s192
        %v195 = vld [vmem:[%s193] sm:$0xf]
        %v196 = vld [vmem:[%s1] sm:$0xf]
        %v197 = vld [vmem:[%s1 + $0x4] sm:$0xf]
        %v198 = vld [vmem:[%s1 + $0x8] sm:$0xf]
        %v199 = vld [vmem:[%s1 + $0xc] sm:$0xf]
        %v200 = vld [vmem:[%s1 + $0x10] sm:$0xf]
        %v201 = vld [vmem:[%s1 + $0x14] sm:$0xf]
        %v202 = vld [vmem:[%s2] sm:$0x1]
        %v204 = vlaneseq
        %v205 = vshrl.u32 %v204, 7
        %v206 = vsub.s32 0, %v205
        %v207 = vrot.slane %v202, %v206
        %v215 = vunpack.c.l.b16 %v196
        %v216 = vunpack.c.l.b16 %v197
        %v217 = vunpack.c.l.b16 %v198
        %v218 = vunpack.c.l.b16 %v199
        %v219 = vunpack.c.l.b16 %v200
        %v220 = vunpack.c.l.b16 %v201
        %v221 = vpack.c.b16 %v216, %v215
        %v222 = vpack.c.b16 %v218, %v217
        %v223 = vpack.c.b16 %v220, %v219
        %vm227 = vcmask 392192
        %v229 = vsel %vm227, %v195, 0
        %231 = vmatprep.subr.bf16.mxu0 0
        %232 = vmatpush1.bf16.msra.mxu0 0
        %233 = vmatprep.subr.bf16.mxu0 0
        %234 = vmatpush1.bf16.msra.mxu0 0
        %235 = vmatprep.subr.bf16.mxu0 0
        %236 = vmatpush1.bf16.msra.mxu0 0
        %237 = vmatprep.subr.bf16.mxu0 0
        %238 = vmatpush1.bf16.msra.mxu0 0
        %239 = vmatprep.subr.bf16.mxu0 0
        %240 = vmatpush1.bf16.msra.mxu0 0
        %241 = vmatprep.subr.bf16.mxu0 0
        %242 = vmatpush1.bf16.msra.mxu0 %v223
        %243 = vmatprep.subr.bf16.mxu0 0
        %244 = vmatpush1.bf16.msra.mxu0 %v222
        %245 = vmatprep.subr.bf16.mxu0 0
        %246 = vmatpush1.bf16.msra.mxu0 %v221
        %247 = vmatprep.subr.bf16.mxu0 0
        %248 = vmatpush2.bf16.msra.mxu0 0
        %249 = vmatprep.subr.bf16.mxu0 0
        %250 = vmatpush2.bf16.msra.mxu0 0
        %251 = vmatprep.subr.bf16.mxu0 0
        %252 = vmatpush2.bf16.msra.mxu0 0
        %253 = vmatprep.subr.bf16.mxu0 0
        %254 = vmatpush2.bf16.msra.mxu0 0
        %255 = vmatprep.subr.bf16.mxu0 0
        %256 = vmatpush2.bf16.msra.mxu0 0
        %257 = vmatprep.subr.bf16.mxu0 0
        %258 = vmatpush2.bf16.msra.mxu0 0
        %259 = vmatprep.subr.bf16.mxu0 0
        %260 = vmatpush2.bf16.msra.mxu0 0
        %261 = vmatprep.subr.bf16.mxu0 0
        %262 = vmatpush2.bf16.msra.mxu0 0
        %263 = vmatprep.mubr.bf16.mxu0 0
        %264 = vmatmul.mubr.bf16.gmra.mxu0 %v229
        %v265 = vpop.f32.mrf.mxu0
        %v266 = vadd.f32 %v207, %v265
        %v267 = vpop.f32.mrf.mxu0
        %v268 = vpop.f32.mrf.mxu0
        %v269 = vpop.f32.mrf.mxu0
        %270 = vdwg.mxu0
        %vm271 = vcmask 261120
        %272 = vst.msk [vmem:[%s185] sm:$0xff] %vm271, %v266
        %s273 = sand.u32 %s109, 1
        %s274 = scalar_lea.sflag [#allocation3], %s273
        %s275 = sand.u32 %s109, 1
        %s276 = smul.addr %s275, 8
        %s277 = scalar_lea.vmem [#allocation2], %s276
        // Predicated region
        $region33: #{patch_embed_forward.1} parent=31 // pred_check
          %p278 = pneg %p119
        $region34: #{patch_embed_forward.1} parent=31 // pred_check_branch
          %280 = sbr.rel (%p278) target = $region36
        $region35: #{patch_embed_forward.1} parent=31 // pred_region
          %s282 = ssub.s32 128, 128
          %283 = vsyncadd %s274, %s282
          %s284 = smul.addr %s21, 2
          %s285 = sadd.s32 %s22, %s284
          %s286 = smul.addr %s285, 128
          %s287 = scalar_lea.hbm %s3, %s286
          %s289 = sshll.u32 %s277, 4
          %s290 = int_to_ptr.vmem [resolvable:$true] %s289
          %292 = dma.vmem_to_hbm [thread:$0]  %s290, 128, %s287, %s274
        $region36: #{patch_embed_forward.1} parent=31 // pred_fallthru
          _
      $region32: #{patch_embed_forward.1} parent=5 // pred_fallthru
        _
      %p293 = scmp.le.s32.totalorder 2, %s12
      // Predicated region
      $region37: #{patch_embed_forward.1} parent=5 // pred_check
        %p294 = pneg %p293
      $region38: #{patch_embed_forward.1} parent=5 // pred_check_branch
        %296 = sbr.rel (%p294) target = $region40
      $region39: #{patch_embed_forward.1} parent=5 // pred_region
        %s297 = ssub.s32 %s12, 2
        // Predicated region
        $region41: #{patch_embed_forward.1} parent=39 // pred_check
          %p298 = pneg %p125
        $region42: #{patch_embed_forward.1} parent=39 // pred_check_branch
          %300 = sbr.rel (%p298) target = $region44
        $region43: #{patch_embed_forward.1} parent=39 // pred_region
          %s301 = sand.u32 %s110, 1
          %s302 = scalar_lea.sflag [#allocation3], %s301
          %s303 = sand.u32 %s110, 1
          %s304 = smul.addr %s303, 8
          %s305 = scalar_lea.vmem [#allocation2], %s304
          %306 = dma.done %s302, 128
        $region44: #{patch_embed_forward.1} parent=39 // pred_fallthru
          _
      $region40: #{patch_embed_forward.1} parent=5 // pred_fallthru
        _
    $region6: #{patch_embed_forward.1} parent=1 // loop_footer
      %s16 = sadd.s32 1, %s12
    $region7: #{patch_embed_forward.1} parent=1 // loop_footer_branch
      %11 = sbr.rel target = $region3
    $region8: #{patch_embed_forward.1} parent=1 // loop_exit
      _
    %307 = vsyncpa [#allocation3], 1
    %s308 = scalar_lea.sflag [#allocation3], 1
    %309 = vsyncpa %s308, 1

</llo_original>
